<compile_context>
chip_gen: v6e
topology: v6e:2x2x1
jax: 0.10.0
libtpu: 0.0.40
codegen_flags: <defaults>
</compile_context>

<pallas_src>
import jax
import jax.numpy as jnp
from jax.experimental import pallas as pl
from jax.experimental.pallas import tpu as pltpu


SPIKE_SIZE = 121
N_FILTERS = (256, 128)


def _round_up(x, m):
    return ((x + m - 1) // m) * m


def _ceil_div(a, b):
    return -(-a // b)


def _choose_tb(batch):
    """Padding-aware batch-tile choice (multiple of 8, >=2 grid steps)."""
    target = 2048                                   # amortize ~0.35us/step
    n_tiles = max(1, _ceil_div(batch, target))
    tb = _ceil_div(batch, n_tiles)                  # spread rows evenly
    if batch > 8:
        tb = min(tb, _ceil_div(batch, 2))           # v7x: use both TensorCores
    return max(8, _round_up(tb, 8))


def denoiser_kernel(x_ref, w1_ref, w2_ref, w3_ref, b3_ref, o_ref):
    # x arrives as f32 (tb, 242); cast to the weight dtype right before the dot.
    x = x_ref[...].astype(w1_ref.dtype)
    # Layer 1: Linear(242 -> 256, no bias) + ReLU (f32 accumulation).
    h1 = jnp.dot(x, w1_ref[...], preferred_element_type=jnp.float32)
    h1 = jnp.maximum(h1, 0.0)
    # Layer 2: Linear(256 -> 128, no bias) + ReLU.
    h2 = jnp.dot(h1.astype(w2_ref.dtype), w2_ref[...],
                 preferred_element_type=jnp.float32)
    h2 = jnp.maximum(h2, 0.0)
    # Output layer: Linear(128 -> 121, padded to 128 cols) + bias (f32).
    out = jnp.dot(h2.astype(w3_ref.dtype), w3_ref[...],
                  preferred_element_type=jnp.float32)
    out = out + b3_ref[...]                         # (tb,128) + (1,128)
    # Write either the 121 real columns or the full 128-wide padded slab.
    o_ref[...] = out[:, :o_ref.shape[1]].astype(o_ref.dtype)


def prepare_params(w1, w2, w3, b3, compute_dtype=jnp.bfloat16):
    """One-time weight preparation (cache the result across forward calls).

    Expects (in, out) layout:
      w1: (2*spike, feat1), w2: (feat1, feat2), w3: (feat2, spike), b3: (spike,)
    (transpose PyTorch `linear.weight` before calling).  w3/b3 are zero-padded
    to 128 output columns (numerically exact); w1/w2 are only cast.
    """
    feat2, spike = w3.shape
    d_out_pad = _round_up(spike, 128)
    w1_c = jnp.asarray(w1, compute_dtype)                          # (242, 256)
    w2_c = jnp.asarray(w2, compute_dtype)                          # (256, 128)
    w3_p = jnp.zeros((feat2, d_out_pad), compute_dtype)
    w3_p = w3_p.at[:, :spike].set(jnp.asarray(w3, compute_dtype))  # (128, 128)
    b3_p = jnp.zeros((1, d_out_pad), jnp.float32)
    b3_p = b3_p.at[0, :spike].set(jnp.asarray(b3, jnp.float32))    # (1, 128)
    return w1_c, w2_c, w3_p, b3_p


def two_chan_denoiser_forward(x, params, *, out_dtype=jnp.float32,
                              pad_output=False, tb=None):
    """x: (B, 2, spike_size) f32, params from prepare_params().

    Returns (B, spike_size) by default (PyTorch semantics), or the lane-dense
    (B, 128) padded slab if pad_output=True.
    """
    w1, w2, w3_p, b3_p = params
    spike_size = x.shape[-1]
    d_in = 2 * spike_size
    feat1 = w1.shape[1]
    feat2 = w2.shape[1]
    d_out_pad = w3_p.shape[1]
    assert w1.shape[0] == d_in, (w1.shape, d_in)

    # glue: torch.reshape(x, (-1, 2 * spike_size))  -- metadata-only in XLA.
    x2 = jnp.reshape(x, (-1, d_in))
    if x2.dtype != jnp.float32:
        x2 = x2.astype(jnp.float32)
    B = x2.shape[0]

    if tb is None:
        tb = _choose_tb(B)
    tb = max(8, _round_up(tb, 8))
    grid = (pl.cdiv(B, tb),)

    out_cols = d_out_pad if pad_output else spike_size
    out_itemsize = jnp.dtype(out_dtype).itemsize
    w_itemsize = jnp.dtype(w1.dtype).itemsize

    flops = 2 * B * (d_in * feat1 + feat1 * feat2 + feat2 * d_out_pad)
    bytes_accessed = (B * d_in * 4                          # f32 x streamed in
                      + B * out_cols * out_itemsize         # output writeback
                      + (w1.size + w2.size + w3_p.size) * w_itemsize
                      + b3_p.size * 4)

    out = pl.pallas_call(
        denoiser_kernel,
        out_shape=jax.ShapeDtypeStruct((B, out_cols), out_dtype),
        grid=grid,
        in_specs=[
            pl.BlockSpec((tb, d_in), lambda i: (i, 0)),         # x: streamed f32
            pl.BlockSpec((d_in, feat1), lambda i: (0, 0)),      # w1: resident
            pl.BlockSpec((feat1, feat2), lambda i: (0, 0)),     # w2: resident
            pl.BlockSpec((feat2, d_out_pad), lambda i: (0, 0)), # w3: resident
            pl.BlockSpec((1, d_out_pad), lambda i: (0, 0)),     # b3: resident
        ],
        out_specs=pl.BlockSpec((tb, out_cols), lambda i: (i, 0)),
        compiler_params=pltpu.CompilerParams(
            dimension_semantics=("parallel",)),
        cost_estimate=pl.CostEstimate(flops=flops, transcendentals=0,
                                      bytes_accessed=bytes_accessed),
    )(x2, w1, w2, w3_p, b3_p)
    return out


def init_params(key, n_filters=N_FILTERS, spike_size=SPIKE_SIZE):
    """Deterministic synthetic params mirroring the nn.Module shapes, in
    (in, out) layout."""
    feat1, feat2 = n_filters
    k1, k2, k3, k4 = jax.random.split(key, 4)
    d_in = 2 * spike_size

    def uniform_init(k, shape, fan_in):
        bound = 1.0 / (fan_in ** 0.5)
        return jax.random.uniform(k, shape, jnp.float32, -bound, bound)

    w1 = uniform_init(k1, (d_in, feat1), d_in)         # (242, 256)
    w2 = uniform_init(k2, (feat1, feat2), feat1)       # (256, 128)
    w3 = uniform_init(k3, (feat2, spike_size), feat2)  # (128, 121)
    b3 = uniform_init(k4, (spike_size,), feat2)        # (121,)
    return w1, w2, w3, b3


def reference_forward(x, w1, w2, w3, b3, compute_dtype=jnp.float32):
    """Pure-JAX reference mirroring the PyTorch module; optional bf16 operand
    casting to match the kernel's numerics (accumulation always f32)."""
    spike_size = x.shape[-1]
    h = jnp.reshape(x, (-1, 2 * spike_size)).astype(jnp.float32)
    h = jnp.dot(h.astype(compute_dtype), w1.astype(compute_dtype),
                preferred_element_type=jnp.float32)
    h = jnp.maximum(h, 0.0)
    h = jnp.dot(h.astype(compute_dtype), w2.astype(compute_dtype),
                preferred_element_type=jnp.float32)
    h = jnp.maximum(h, 0.0)
    out = jnp.dot(h.astype(compute_dtype), w3.astype(compute_dtype),
                  preferred_element_type=jnp.float32)
    return out + b3[None, :].astype(jnp.float32)


# TODO(synk): TwoChanDenoiser.train (optimizer/data loading) and .load
# (checkpoint I/O) are host-side utilities and are intentionally not ported.

if __name__ == "__main__":
    key = jax.random.PRNGKey(0)
    k_param, k_x = jax.random.split(key)

    w1, w2, w3, b3 = init_params(k_param)
    # Prepare (cast/pad) the weights exactly once, outside the per-call path.
    params = jax.block_until_ready(prepare_params(w1, w2, w3, b3))

    # Small ragged batch of two-channel waveforms: (batch=20, channels=2, 121).
    # The default tb chooser gives tb=16 -> grid of 2 steps (16 + partial 4),
    # exercising the pipelined / boundary-masked path even at demo scale.
    x = jax.random.normal(k_x, (20, 2, SPIKE_SIZE), dtype=jnp.float32)

    out = two_chan_denoiser_forward(x, params)
    out = jax.block_until_ready(out)

    ref_matched = reference_forward(x, w1, w2, w3, b3, compute_dtype=jnp.bfloat16)
    ref_f32 = reference_forward(x, w1, w2, w3, b3, compute_dtype=jnp.float32)

    assert out.shape == (20, SPIKE_SIZE), out.shape
    # Tight check vs a reference using the same bf16-operand / f32-accum math.
    assert jnp.allclose(out, ref_matched, atol=2e-3, rtol=2e-3), \
        "mismatch vs bf16 reference"
    # Loose sanity check vs the pure-f32 PyTorch-equivalent reference.
    assert jnp.allclose(out, ref_f32, atol=5e-2, rtol=5e-2), \
        "mismatch vs f32 reference"

    # Exercise the lane-dense padded-slab + bf16-writeback path once.
    out_pad = two_chan_denoiser_forward(x, params, out_dtype=jnp.bfloat16,
                                        pad_output=True)
    out_pad = jax.block_until_ready(out_pad)
    assert out_pad.shape == (20, 128), out_pad.shape
    assert jnp.allclose(out_pad[:, :SPIKE_SIZE].astype(jnp.float32),
                        ref_matched, atol=2e-2, rtol=2e-2), \
        "mismatch vs bf16 reference (padded/bf16 output path)"

    print("KERNEL_OK")
</pallas_src>

<mosaic_0001>
module attributes {stable_mosaic.version = 11 : i64} {
  func.func @denoiser_kernel(%arg0: i32, %arg1: memref<16x242xf32, #tpu.memory_space<vmem>>, %arg2: memref<242x256xbf16, #tpu.memory_space<vmem>>, %arg3: memref<256x128xbf16, #tpu.memory_space<vmem>>, %arg4: memref<128x128xbf16, #tpu.memory_space<vmem>>, %arg5: memref<1x128xf32, #tpu.memory_space<vmem>>, %arg6: memref<16x121xf32, #tpu.memory_space<vmem>>) attributes {dimension_semantics = [#tpu.dimension_semantics<parallel>], iteration_bounds = array<i64: 2>, scalar_prefetch = 0 : i64, scratch_operands = 0 : i64, tpu.core_type = #tpu.core_type<tc>, window_params = [{transform_indices = @transform_0, window_bounds = array<i64: 16, 242>}, {pipeline_mode = #tpu.pipeline_mode<synchronous>, transform_indices = @transform_1, window_bounds = array<i64: 242, 256>}, {pipeline_mode = #tpu.pipeline_mode<synchronous>, transform_indices = @transform_2, window_bounds = array<i64: 256, 128>}, {pipeline_mode = #tpu.pipeline_mode<synchronous>, transform_indices = @transform_3, window_bounds = array<i64: 128, 128>}, {pipeline_mode = #tpu.pipeline_mode<synchronous>, transform_indices = @transform_4, window_bounds = array<i64: 1, 128>}, {transform_indices = @transform_5, window_bounds = array<i64: 16, 121>}]} {
    %c0 = arith.constant 0 : index
    %c0_0 = arith.constant 0 : index
    %0 = vector.load %arg1[%c0, %c0_0] : memref<16x242xf32, #tpu.memory_space<vmem>>, vector<16x242xf32>
    %1 = arith.truncf %0 : vector<16x242xf32> to vector<16x242xbf16>
    %c0_1 = arith.constant 0 : index
    %c0_2 = arith.constant 0 : index
    %2 = vector.load %arg2[%c0_1, %c0_2] : memref<242x256xbf16, #tpu.memory_space<vmem>>, vector<242x256xbf16>
    %cst = arith.constant dense<0.000000e+00> : vector<16x256xf32>
    %3 = tpu.matmul %1, %2, %cst {dimension_numbers = #tpu.dot_dimension_numbers<[1], [0], [0], [1], [0, 0, 1, 1], [], []>} : vector<16x242xbf16>, vector<242x256xbf16>, vector<16x256xf32> -> vector<16x256xf32>
    %cst_3 = arith.constant 0.000000e+00 : f32
    %4 = vector.broadcast %cst_3 : f32 to vector<16x256xf32>
    %5 = arith.maximumf %3, %4 : vector<16x256xf32>
    %6 = arith.truncf %5 : vector<16x256xf32> to vector<16x256xbf16>
    %c0_4 = arith.constant 0 : index
    %c0_5 = arith.constant 0 : index
    %7 = vector.load %arg3[%c0_4, %c0_5] : memref<256x128xbf16, #tpu.memory_space<vmem>>, vector<256x128xbf16>
    %cst_6 = arith.constant dense<0.000000e+00> : vector<16x128xf32>
    %8 = tpu.matmul %6, %7, %cst_6 {dimension_numbers = #tpu.dot_dimension_numbers<[1], [0], [0], [1], [0, 0, 1, 1], [], []>} : vector<16x256xbf16>, vector<256x128xbf16>, vector<16x128xf32> -> vector<16x128xf32>
    %cst_7 = arith.constant 0.000000e+00 : f32
    %9 = vector.broadcast %cst_7 : f32 to vector<16x128xf32>
    %10 = arith.maximumf %8, %9 : vector<16x128xf32>
    %11 = arith.truncf %10 : vector<16x128xf32> to vector<16x128xbf16>
    %c0_8 = arith.constant 0 : index
    %c0_9 = arith.constant 0 : index
    %12 = vector.load %arg4[%c0_8, %c0_9] : memref<128x128xbf16, #tpu.memory_space<vmem>>, vector<128x128xbf16>
    %cst_10 = arith.constant dense<0.000000e+00> : vector<16x128xf32>
    %13 = tpu.matmul %11, %12, %cst_10 {dimension_numbers = #tpu.dot_dimension_numbers<[1], [0], [0], [1], [0, 0, 1, 1], [], []>} : vector<16x128xbf16>, vector<128x128xbf16>, vector<16x128xf32> -> vector<16x128xf32>
    %c0_11 = arith.constant 0 : index
    %c0_12 = arith.constant 0 : index
    %14 = vector.load %arg5[%c0_11, %c0_12] : memref<1x128xf32, #tpu.memory_space<vmem>>, vector<1x128xf32>
    %15 = vector.broadcast %14 : vector<1x128xf32> to vector<16x128xf32>
    %16 = arith.addf %13, %15 : vector<16x128xf32>
    %17 = vector.extract_strided_slice %16 {offsets = [0, 0], sizes = [16, 121], strides = [1, 1]} : vector<16x128xf32> to vector<16x121xf32>
    %c0_13 = arith.constant 0 : index
    %c0_14 = arith.constant 0 : index
    %18 = vector.load %arg6[%c0_13, %c0_14] : memref<16x121xf32, #tpu.memory_space<vmem>>, vector<16x121xf32>
    tpu.vector_store %arg6[%c0_13, %c0_14], %17 {strides = array<i32>} : memref<16x121xf32, #tpu.memory_space<vmem>>, vector<16x121xf32>,
    return
  }
  func.func @transform_0(%arg0: i32) -> (i32, i32) {
    %c0_i32 = arith.constant 0 : i32
    %c0_i32_0 = arith.constant 0 : i32
    return %arg0, %c0_i32 : i32, i32
  }
  func.func @transform_1(%arg0: i32) -> (i32, i32) {
    %c0_i32 = arith.constant 0 : i32
    %c0_i32_0 = arith.constant 0 : i32
    %c0_i32_1 = arith.constant 0 : i32
    return %c0_i32, %c0_i32_0 : i32, i32
  }
  func.func @transform_2(%arg0: i32) -> (i32, i32) {
    %c0_i32 = arith.constant 0 : i32
    %c0_i32_0 = arith.constant 0 : i32
    %c0_i32_1 = arith.constant 0 : i32
    return %c0_i32, %c0_i32_0 : i32, i32
  }
  func.func @transform_3(%arg0: i32) -> (i32, i32) {
    %c0_i32 = arith.constant 0 : i32
    %c0_i32_0 = arith.constant 0 : i32
    %c0_i32_1 = arith.constant 0 : i32
    return %c0_i32, %c0_i32_0 : i32, i32
  }
  func.func @transform_4(%arg0: i32) -> (i32, i32) {
    %c0_i32 = arith.constant 0 : i32
    %c0_i32_0 = arith.constant 0 : i32
    %c0_i32_1 = arith.constant 0 : i32
    return %c0_i32, %c0_i32_0 : i32, i32
  }
  func.func @transform_5(%arg0: i32) -> (i32, i32) {
    %c0_i32 = arith.constant 0 : i32
    %c0_i32_0 = arith.constant 0 : i32
    return %arg0, %c0_i32 : i32, i32
  }
}

</mosaic_0001>

<llo_original>
// kernel: tpu_custom_call.1
$region0: #{tpu_custom_call.1}
  #allocation0 [shape = 'u32[]', space=smem, size = 0x4, offset = 0x4, fixed_abs, tag = 'smem constant byte address 0x4 - core index']
  #allocation1 [shape = 'u32[144,128]{1,0:T(1,128)}', space=vmem, size = 0x12000, scoped, tag = 'internal scratch']
  %s0 = inlined_call_operand.hbm [shape: f32[20,242], index: 0, kind: input, shape index: {}]
  %s1 = inlined_call_operand.hbm [shape: bf16[242,256], index: 1, kind: input, shape index: {}]
  %s2 = inlined_call_operand.hbm [shape: bf16[256,128], index: 2, kind: input, shape index: {}]
  %s3 = inlined_call_operand.hbm [shape: bf16[128,128], index: 3, kind: input, shape index: {}]
  %s4 = inlined_call_operand.vmem [shape: f32[1,128], index: 4, kind: input, shape index: {}]
  %s5 = inlined_call_operand.hbm [shape: f32[20,121], index: 5, kind: output, shape index: {}]
  %s6 = sld [smem:[#allocation0]]
  $region69: #{tpu_custom_call.1} parent=0
    _
  %s8 = ssub.s32 1, %s6
  %s9 = scalar_select 0, %s8, %s6
  $region1: #{tpu_custom_call.1} parent=0
    #allocation2 [shape = 'u8[32768]{0}', space=vmem, size = 0x8000, scoped, tag = 'input window, operand 0']
    #allocation3 [shape = 's32[2]{0}', space=sflag, size = 0x8, scoped, tag = 'scoped memory for tpu_custom_call.1']
    #allocation4 [shape = 's32[2]{0}', space=sflag, size = 0x8, scoped, tag = 'scoped memory for tpu_custom_call.1']
    #allocation5 [shape = 'u8[126976]{0}', space=vmem, size = 0x1f000, scoped, tag = 'input window, operand 1, single buffered']
    #allocation6 [shape = 's32[1]{0}', space=sflag, size = 0x4, scoped, tag = 'scoped memory for tpu_custom_call.1']
    #allocation7 [shape = 'u8[65536]{0}', space=vmem, size = 0x10000, scoped, tag = 'input window, operand 2, single buffered']
    #allocation8 [shape = 'u8[32768]{0}', space=vmem, size = 0x8000, scoped, tag = 'input window, operand 3, single buffered']
    #allocation9 [shape = 's32[1]{0}', space=sflag, size = 0x4, scoped, tag = 'scoped memory for tpu_custom_call.1']
    #allocation10 [shape = 'u8[16384]{0}', space=vmem, size = 0x4000, scoped, tag = 'output window, operand 0']
    %10 = vsyncpa [#allocation3], 0
    %s11 = scalar_lea.sflag [#allocation3], 1
    %12 = vsyncpa %s11, 0
    %13 = vsyncpa [#allocation6], 0
    %14 = vsyncpa [#allocation9], 0
    %15 = vsyncpa [#allocation4], 0
    %s16 = scalar_lea.sflag [#allocation4], 1
    %17 = vsyncpa %s16, 0
    loop: start=0, step=1, limit=4
    $region2: #{tpu_custom_call.1} parent=1 // loop_pre_header
      _
    $region3: #{tpu_custom_call.1} parent=1 // loop_header
      %s19 = sphi 0, %s23
      %p20 = scmp.ge.s32.totalorder %s19, 4
      %s29 = sphi 0, %s31
      %s32 = sphi 0, %s29
      %s33 = sphi 0, %s32
      %s49 = sphi 0, %s33
      %s53 = sphi 0, %s53
      %s55 = sphi 0, %s53
      %s56 = sphi 0, %s55
      %s70 = sphi 0, %s56
      %s74 = sphi 0, %s74
      %s76 = sphi 0, %s74
      %s77 = sphi 0, %s76
      %s91 = sphi 0, %s77
      %s95 = sphi 0, %s95
      %s97 = sphi 0, %s95
      %s98 = sphi 0, %s97
      %s112 = sphi 0, %s98
      %s116 = sphi 0, %s116
      %s118 = sphi 0, %s116
      %s119 = sphi 0, %s118
      %s133 = sphi 0, %s119
      %s139 = sphi 0, %s141
      %s142 = sphi 0, %s139
      %s143 = sphi 0, %s142
      %s159 = sphi 0, %s143
    $region4: #{tpu_custom_call.1} parent=1 // loop_header_branch
      %22 = sbr.rel (%p20) target = $region8
    $region5: #{tpu_custom_call.1} parent=1 // loop_body
      %s24 = ssub.s32 %s19, 1
      %s25 = ssub.s32 %s19, 2
      %s26 = sadd.s32 %s19, 1
      %s27 = ssub.s32 %s19, %s26
      %p28 = scmp.eq.s32.totalorder %s27, 0
      %s30 = sadd.s32 %s29, 1
      %s31 = scalar_select %p28, %s29, %s30
      %p34 = pneg %p28
      %p35 = scmp.eq.s32.totalorder %s19, 1
      %p36 = por %p34, %p35
      %p37 = scmp.ne.s32.totalorder %s29, %s32
      %p38 = scmp.eq.s32.totalorder %s19, 0
      %p39 = por %p37, %p38
      %p40 = scmp.ne.s32.totalorder %s29, %s32
      %p41 = scmp.eq.s32.totalorder %s24, 1
      %p42 = por %p40, %p41
      %p43 = scmp.ne.s32.totalorder %s32, %s33
      %p44 = scmp.eq.s32.totalorder %s24, 0
      %p45 = por %p43, %p44
      %p46 = scmp.ne.s32.totalorder %s32, %s33
      %p47 = scmp.eq.s32.totalorder %s25, 1
      %p48 = por %p46, %p47
      %p50 = scmp.ne.s32.totalorder %s33, %s49
      %p51 = scmp.eq.s32.totalorder %s25, 0
      %p52 = por %p50, %p51
      %s54 = sadd.s32 %s53, 1
      %p57 = scmp.eq.s32.totalorder %s19, 1
      %p58 = scmp.ne.s32.totalorder %s53, %s55
      %p59 = scmp.eq.s32.totalorder %s19, 0
      %p60 = por %p58, %p59
      %p61 = scmp.ne.s32.totalorder %s53, %s55
      %p62 = scmp.eq.s32.totalorder %s24, 1
      %p63 = por %p61, %p62
      %p64 = scmp.ne.s32.totalorder %s55, %s56
      %p65 = scmp.eq.s32.totalorder %s24, 0
      %p66 = por %p64, %p65
      %p67 = scmp.ne.s32.totalorder %s55, %s56
      %p68 = scmp.eq.s32.totalorder %s25, 1
      %p69 = por %p67, %p68
      %p71 = scmp.ne.s32.totalorder %s56, %s70
      %p72 = scmp.eq.s32.totalorder %s25, 0
      %p73 = por %p71, %p72
      %s75 = sadd.s32 %s74, 1
      %p78 = scmp.eq.s32.totalorder %s19, 1
      %p79 = scmp.ne.s32.totalorder %s74, %s76
      %p80 = scmp.eq.s32.totalorder %s19, 0
      %p81 = por %p79, %p80
      %p82 = scmp.ne.s32.totalorder %s74, %s76
      %p83 = scmp.eq.s32.totalorder %s24, 1
      %p84 = por %p82, %p83
      %p85 = scmp.ne.s32.totalorder %s76, %s77
      %p86 = scmp.eq.s32.totalorder %s24, 0
      %p87 = por %p85, %p86
      %p88 = scmp.ne.s32.totalorder %s76, %s77
      %p89 = scmp.eq.s32.totalorder %s25, 1
      %p90 = por %p88, %p89
      %p92 = scmp.ne.s32.totalorder %s77, %s91
      %p93 = scmp.eq.s32.totalorder %s25, 0
      %p94 = por %p92, %p93
      %s96 = sadd.s32 %s95, 1
      %p99 = scmp.eq.s32.totalorder %s19, 1
      %p100 = scmp.ne.s32.totalorder %s95, %s97
      %p101 = scmp.eq.s32.totalorder %s19, 0
      %p102 = por %p100, %p101
      %p103 = scmp.ne.s32.totalorder %s95, %s97
      %p104 = scmp.eq.s32.totalorder %s24, 1
      %p105 = por %p103, %p104
      %p106 = scmp.ne.s32.totalorder %s97, %s98
      %p107 = scmp.eq.s32.totalorder %s24, 0
      %p108 = por %p106, %p107
      %p109 = scmp.ne.s32.totalorder %s97, %s98
      %p110 = scmp.eq.s32.totalorder %s25, 1
      %p111 = por %p109, %p110
      %p113 = scmp.ne.s32.totalorder %s98, %s112
      %p114 = scmp.eq.s32.totalorder %s25, 0
      %p115 = por %p113, %p114
      %s117 = sadd.s32 %s116, 1
      %p120 = scmp.eq.s32.totalorder %s19, 1
      %p121 = scmp.ne.s32.totalorder %s116, %s118
      %p122 = scmp.eq.s32.totalorder %s19, 0
      %p123 = por %p121, %p122
      %p124 = scmp.ne.s32.totalorder %s116, %s118
      %p125 = scmp.eq.s32.totalorder %s24, 1
      %p126 = por %p124, %p125
      %p127 = scmp.ne.s32.totalorder %s118, %s119
      %p128 = scmp.eq.s32.totalorder %s24, 0
      %p129 = por %p127, %p128
      %p130 = scmp.ne.s32.totalorder %s118, %s119
      %p131 = scmp.eq.s32.totalorder %s25, 1
      %p132 = por %p130, %p131
      %p134 = scmp.ne.s32.totalorder %s119, %s133
      %p135 = scmp.eq.s32.totalorder %s25, 0
      %p136 = por %p134, %p135
      %s137 = ssub.s32 %s19, %s26
      %p138 = scmp.eq.s32.totalorder %s137, 0
      %s140 = sadd.s32 %s139, 1
      %s141 = scalar_select %p138, %s139, %s140
      %p144 = pneg %p138
      %p145 = scmp.eq.s32.totalorder %s19, 1
      %p146 = por %p144, %p145
      %p147 = scmp.ne.s32.totalorder %s139, %s142
      %p148 = scmp.eq.s32.totalorder %s19, 0
      %p149 = por %p147, %p148
      %p150 = scmp.ne.s32.totalorder %s139, %s142
      %p151 = scmp.eq.s32.totalorder %s24, 1
      %p152 = por %p150, %p151
      %p153 = scmp.ne.s32.totalorder %s142, %s143
      %p154 = scmp.eq.s32.totalorder %s24, 0
      %p155 = por %p153, %p154
      %p156 = scmp.ne.s32.totalorder %s142, %s143
      %p157 = scmp.eq.s32.totalorder %s25, 1
      %p158 = por %p156, %p157
      %p160 = scmp.ne.s32.totalorder %s143, %s159
      %p161 = scmp.eq.s32.totalorder %s25, 0
      %p162 = por %p160, %p161
      %p163 = scmp.le.s32.totalorder 1, %s19
      %p164 = scmp.lt.s32.totalorder %s19, 3
      %p165 = pnand %p163, %p164
      %p166 = pneg %p165
      // Predicated region
      $region9: #{tpu_custom_call.1} parent=5 // pred_check
        _
      $region10: #{tpu_custom_call.1} parent=5 // pred_check_branch
        %168 = sbr.rel (%p165) target = $region12
      $region11: #{tpu_custom_call.1} parent=5 // pred_region
        %s169 = ssub.s32 %s19, 1
        // Predicated region
        $region13: #{tpu_custom_call.1} parent=11 // pred_check
          %p170 = pneg %p66
        $region14: #{tpu_custom_call.1} parent=11 // pred_check_branch
          %172 = sbr.rel (%p170) target = $region16
        $region15: #{tpu_custom_call.1} parent=11 // pred_region
          %s174 = ssub.s32 3968, 3968
          %175 = vsyncadd [#allocation6], %s174
          %s176 = sshll.u32 [#allocation5], 4
          %s177 = int_to_ptr.vmem [resolvable:$true] %s176
          %182 = dma.hbm_to_vmem [thread:$0]  %s1, 3968, %s177, [#allocation6], 128, 128, 8
        $region16: #{tpu_custom_call.1} parent=11 // pred_fallthru
          _
        // Predicated region
        $region17: #{tpu_custom_call.1} parent=11 // pred_check
          %p183 = pneg %p87
        $region18: #{tpu_custom_call.1} parent=11 // pred_check_branch
          %185 = sbr.rel (%p183) target = $region20
        $region19: #{tpu_custom_call.1} parent=11 // pred_region
          %s187 = ssub.s32 2048, 2048
          %188 = vsyncadd [#allocation6], %s187
          %s189 = sshll.u32 [#allocation7], 4
          %s190 = int_to_ptr.vmem [resolvable:$true] %s189
          %195 = dma.hbm_to_vmem [thread:$0]  %s2, 2048, %s190, [#allocation6], 64, 64, 4
        $region20: #{tpu_custom_call.1} parent=11 // pred_fallthru
          _
        // Predicated region
        $region21: #{tpu_custom_call.1} parent=11 // pred_check
          %p196 = pneg %p108
        $region22: #{tpu_custom_call.1} parent=11 // pred_check_branch
          %198 = sbr.rel (%p196) target = $region24
        $region23: #{tpu_custom_call.1} parent=11 // pred_region
          %s200 = ssub.s32 1024, 1024
          %201 = vsyncadd [#allocation9], %s200
          %s202 = sshll.u32 [#allocation8], 4
          %s203 = int_to_ptr.vmem [resolvable:$true] %s202
          %208 = dma.hbm_to_vmem [thread:$0]  %s3, 1024, %s203, [#allocation9], 64, 64, 4
        $region24: #{tpu_custom_call.1} parent=11 // pred_fallthru
          _
        // Predicated region
        $region25: #{tpu_custom_call.1} parent=11 // pred_check
          %p209 = pneg %p129
        $region26: #{tpu_custom_call.1} parent=11 // pred_check_branch
          %211 = sbr.rel (%p209) target = $region28
        $region27: #{tpu_custom_call.1} parent=11 // pred_region
          _
        $region28: #{tpu_custom_call.1} parent=11 // pred_fallthru
          _
      $region12: #{tpu_custom_call.1} parent=5 // pred_fallthru
        _
      %p212 = scmp.lt.s32.totalorder %s19, 2
      // Predicated region
      $region29: #{tpu_custom_call.1} parent=5 // pred_check
        %p213 = pneg %p212
      $region30: #{tpu_custom_call.1} parent=5 // pred_check_branch
        %215 = sbr.rel (%p213) target = $region32
      $region31: #{tpu_custom_call.1} parent=5 // pred_region
        // Predicated region
        $region33: #{tpu_custom_call.1} parent=31 // pred_check
          %p216 = pneg %p39
        $region34: #{tpu_custom_call.1} parent=31 // pred_check_branch
          %218 = sbr.rel (%p216) target = $region36
        $region35: #{tpu_custom_call.1} parent=31 // pred_region
          %s219 = sand.u32 %s29, 1
          %s220 = scalar_lea.sflag [#allocation3], %s219
          %s221 = sand.u32 %s29, 1
          %s222 = smul.addr %s221, 32
          %s223 = scalar_lea.vmem [#allocation2], %s222
          %s224 = smul.u32 2, %s19
          %s225 = ssub.s32 3, %s224
          %p226 = scmp.lt.s32.totalorder %s225, 2
          %s227 = scalar_select %p226, %s225, 2
          %s228 = smul.u32 128, %s227
          %s229 = smul.u32 %s228, 2
          %s231 = ssub.s32 512, %s229
          %232 = vsyncadd %s220, %s231
          %p233 = scmp.ne.s32.totalorder 0, %s229
          %s234 = smul.addr %s224, 2
          %s235 = smul.addr %s234, 128
          %s236 = scalar_lea.hbm %s0, %s235
          %s237 = smul.u32 16, %s227
          %s238 = sshll.u32 %s223, 4
          %s239 = int_to_ptr.vmem [resolvable:$true] %s238
          %s240 = sshll.u32 %s237, 4
          %244 = dma.hbm_to_vmem [thread:$0]  (%p233), %s236, %s240, %s239, %s220, 256, 256, 16
        $region36: #{tpu_custom_call.1} parent=31 // pred_fallthru
          _
      $region32: #{tpu_custom_call.1} parent=5 // pred_fallthru
        _
      %p245 = scmp.le.s32.totalorder 1, %s19
      %p246 = scmp.lt.s32.totalorder %s19, 3
      %p247 = pnand %p245, %p246
      %p248 = pneg %p247
      // Predicated region
      $region37: #{tpu_custom_call.1} parent=5 // pred_check
        _
      $region38: #{tpu_custom_call.1} parent=5 // pred_check_branch
        %250 = sbr.rel (%p247) target = $region40
      $region39: #{tpu_custom_call.1} parent=5 // pred_region
        %s251 = ssub.s32 %s19, 1
        %s252 = sand.u32 %s32, 1
        %s253 = scalar_lea.sflag [#allocation3], %s252
        %s254 = sand.u32 %s32, 1
        %s255 = smul.addr %s254, 32
        %s256 = scalar_lea.vmem [#allocation2], %s255
        // Predicated region
        $region41: #{tpu_custom_call.1} parent=39 // pred_check
          %p257 = pneg %p45
        $region42: #{tpu_custom_call.1} parent=39 // pred_check_branch
          %259 = sbr.rel (%p257) target = $region44
        $region43: #{tpu_custom_call.1} parent=39 // pred_region
          %260 = dma.done %s253, 512
        $region44: #{tpu_custom_call.1} parent=39 // pred_fallthru
          _
        // Predicated region
        $region45: #{tpu_custom_call.1} parent=39 // pred_check
          %p261 = pneg %p66
        $region46: #{tpu_custom_call.1} parent=39 // pred_check_branch
          %263 = sbr.rel (%p261) target = $region48
        $region47: #{tpu_custom_call.1} parent=39 // pred_region
          %264 = dma.done [#allocation6], 3968
        $region48: #{tpu_custom_call.1} parent=39 // pred_fallthru
          _
        // Predicated region
        $region49: #{tpu_custom_call.1} parent=39 // pred_check
          %p265 = pneg %p87
        $region50: #{tpu_custom_call.1} parent=39 // pred_check_branch
          %267 = sbr.rel (%p265) target = $region52
        $region51: #{tpu_custom_call.1} parent=39 // pred_region
          %268 = dma.done [#allocation6], 2048
        $region52: #{tpu_custom_call.1} parent=39 // pred_fallthru
          _
        // Predicated region
        $region53: #{tpu_custom_call.1} parent=39 // pred_check
          %p269 = pneg %p108
        $region54: #{tpu_custom_call.1} parent=39 // pred_check_branch
          %271 = sbr.rel (%p269) target = $region56
        $region55: #{tpu_custom_call.1} parent=39 // pred_region
          %272 = dma.done [#allocation9], 1024
        $region56: #{tpu_custom_call.1} parent=39 // pred_fallthru
          _
        %s273 = sand.u32 %s32, 1
        %s274 = scalar_lea.sflag [#allocation3], %s273
        %s275 = sand.u32 %s32, 1
        %s276 = smul.addr %s275, 32
        %s277 = scalar_lea.vmem [#allocation2], %s276
        %p278 = pneg %p45
        %p279 = pneg %p42
        %p280 = pneg %p66
        %p281 = pneg %p63
        %p282 = pneg %p87
        %p283 = pneg %p84
        %p284 = pneg %p108
        %p285 = pneg %p105
        %p286 = pneg %p129
        %p287 = pneg %p126
        %p288 = pneg %p155
        %p289 = pneg %p152
        %s290 = sand.u32 %s142, 1
        %s291 = scalar_lea.sflag [#allocation4], %s290
        %s292 = sand.u32 %s142, 1
        %s293 = smul.addr %s292, 16
        %s294 = scalar_lea.vmem [#allocation10], %s293
        %s295 = smul.u32 2, %s24
        %s296 = ssub.s32 3, %s295
        %p297 = scmp.lt.s32.totalorder %s296, 2
        %s298 = scalar_select %p297, %s296, 2
        %s299 = smul.u32 128, %s298
        %s300 = smul.u32 %s299, 2
        %s301 = smul.u32 2, %s24
        %s302 = ssub.s32 3, %s301
        %p303 = scmp.lt.s32.totalorder %s302, 2
        %s304 = scalar_select %p303, %s302, 2
        %s305 = smul.u32 128, %s304
        %v307 = vld [vmem:[%s256] sm:$0xff]
        %v308 = vld [vmem:[%s256 + $0x8] sm:$0xff]
        %v309 = vld [vmem:[%s256 + $0x10] sm:$0xff]
        %v310 = vld [vmem:[%s256 + $0x18] sm:$0xff]
        %v311 = vpack.c.bf16 %v309, %v307
        %v312 = vpack.c.bf16 %v310, %v308
        %v313 = vld [vmem:[#allocation5] sm:$0xff]
        %v314 = vld [vmem:[#allocation5 + $0x8] sm:$0xff]
        %v315 = vld [vmem:[#allocation5 + $0x10] sm:$0xff]
        %v316 = vld [vmem:[#allocation5 + $0x18] sm:$0xff]
        %v317 = vld [vmem:[#allocation5 + $0x20] sm:$0xff]
        %v318 = vld [vmem:[#allocation5 + $0x28] sm:$0xff]
        %v319 = vld [vmem:[#allocation5 + $0x30] sm:$0xff]
        %v320 = vld [vmem:[#allocation5 + $0x38] sm:$0xff]
        %v321 = vld [vmem:[#allocation5 + $0x40] sm:$0xff]
        %v322 = vld [vmem:[#allocation5 + $0x48] sm:$0xff]
        %v323 = vld [vmem:[#allocation5 + $0x50] sm:$0xff]
        %v324 = vld [vmem:[#allocation5 + $0x58] sm:$0xff]
        %v325 = vld [vmem:[#allocation5 + $0x60] sm:$0xff]
        %v326 = vld [vmem:[#allocation5 + $0x68] sm:$0xff]
        %v327 = vld [vmem:[#allocation5 + $0x70] sm:$0xff]
        %v328 = vld [vmem:[#allocation5 + $0x78] sm:$0xff]
        %v329 = vld [vmem:[#allocation5 + $0x80] sm:$0xff]
        %v330 = vld [vmem:[#allocation5 + $0x88] sm:$0xff]
        %v331 = vld [vmem:[#allocation5 + $0x90] sm:$0xff]
        %v332 = vld [vmem:[#allocation5 + $0x98] sm:$0xff]
        %v333 = vld [vmem:[#allocation5 + $0xa0] sm:$0xff]
        %v334 = vld [vmem:[#allocation5 + $0xa8] sm:$0xff]
        %v335 = vld [vmem:[#allocation5 + $0xb0] sm:$0xff]
        %v336 = vld [vmem:[#allocation5 + $0xb8] sm:$0xff]
        %v337 = vld [vmem:[#allocation5 + $0xc0] sm:$0xff]
        %v338 = vld [vmem:[#allocation5 + $0xc8] sm:$0xff]
        %v339 = vld [vmem:[#allocation5 + $0xd0] sm:$0xff]
        %v340 = vld [vmem:[#allocation5 + $0xd8] sm:$0xff]
        %v341 = vld [vmem:[#allocation5 + $0xe0] sm:$0xff]
        %v342 = vld [vmem:[#allocation5 + $0xe8] sm:$0xff]
        %v343 = vld [vmem:[#allocation5 + $0xf0] sm:$0x11]
        %v375 = vunpack.c.l.b16 %v313
        %v376 = vunpack.c.h.b16 %v313
        %v377 = vunpack.c.l.b16 %v314
        %v378 = vunpack.c.h.b16 %v314
        %v379 = vunpack.c.l.b16 %v315
        %v380 = vunpack.c.h.b16 %v315
        %v381 = vunpack.c.l.b16 %v316
        %v382 = vunpack.c.h.b16 %v316
        %v383 = vunpack.c.l.b16 %v317
        %v384 = vunpack.c.h.b16 %v317
        %v385 = vunpack.c.l.b16 %v318
        %v386 = vunpack.c.h.b16 %v318
        %v387 = vunpack.c.l.b16 %v319
        %v388 = vunpack.c.h.b16 %v319
        %v389 = vunpack.c.l.b16 %v320
        %v390 = vunpack.c.h.b16 %v320
        %v391 = vunpack.c.l.b16 %v321
        %v392 = vunpack.c.h.b16 %v321
        %v393 = vunpack.c.l.b16 %v322
        %v394 = vunpack.c.h.b16 %v322
        %v395 = vunpack.c.l.b16 %v323
        %v396 = vunpack.c.h.b16 %v323
        %v397 = vunpack.c.l.b16 %v324
        %v398 = vunpack.c.h.b16 %v324
        %v399 = vunpack.c.l.b16 %v325
        %v400 = vunpack.c.h.b16 %v325
        %v401 = vunpack.c.l.b16 %v326
        %v402 = vunpack.c.h.b16 %v326
        %v403 = vunpack.c.l.b16 %v327
        %v404 = vunpack.c.h.b16 %v327
        %v405 = vunpack.c.l.b16 %v328
        %v406 = vunpack.c.h.b16 %v328
        %v407 = vunpack.c.l.b16 %v329
        %v408 = vunpack.c.h.b16 %v329
        %v409 = vunpack.c.l.b16 %v330
        %v410 = vunpack.c.h.b16 %v330
        %v411 = vunpack.c.l.b16 %v331
        %v412 = vunpack.c.h.b16 %v331
        %v413 = vunpack.c.l.b16 %v332
        %v414 = vunpack.c.h.b16 %v332
        %v415 = vunpack.c.l.b16 %v333
        %v416 = vunpack.c.h.b16 %v333
        %v417 = vunpack.c.l.b16 %v334
        %v418 = vunpack.c.h.b16 %v334
        %v419 = vunpack.c.l.b16 %v335
        %v420 = vunpack.c.h.b16 %v335
        %v421 = vunpack.c.l.b16 %v336
        %v422 = vunpack.c.h.b16 %v336
        %v423 = vunpack.c.l.b16 %v337
        %v424 = vunpack.c.h.b16 %v337
        %v425 = vunpack.c.l.b16 %v338
        %v426 = vunpack.c.h.b16 %v338
        %v427 = vunpack.c.l.b16 %v339
        %v428 = vunpack.c.h.b16 %v339
        %v429 = vunpack.c.l.b16 %v340
        %v430 = vunpack.c.h.b16 %v340
        %v431 = vunpack.c.l.b16 %v341
        %v432 = vunpack.c.h.b16 %v341
        %v433 = vunpack.c.l.b16 %v342
        %v434 = vunpack.c.h.b16 %v342
        %v435 = vunpack.c.l.b16 %v343
        %v436 = vunpack.c.h.b16 %v343
        %v437 = vpack.c.b16 %v377, %v375
        %v438 = vpack.c.b16 %v378, %v376
        %v439 = vpack.c.b16 %v381, %v379
        %v440 = vpack.c.b16 %v382, %v380
        %v441 = vpack.c.b16 %v385, %v383
        %v442 = vpack.c.b16 %v386, %v384
        %v443 = vpack.c.b16 %v389, %v387
        %v444 = vpack.c.b16 %v390, %v388
        %v445 = vpack.c.b16 %v393, %v391
        %v446 = vpack.c.b16 %v394, %v392
        %v447 = vpack.c.b16 %v397, %v395
        %v448 = vpack.c.b16 %v398, %v396
        %v449 = vpack.c.b16 %v401, %v399
        %v450 = vpack.c.b16 %v402, %v400
        %v451 = vpack.c.b16 %v405, %v403
        %v452 = vpack.c.b16 %v406, %v404
        %v453 = vpack.c.b16 %v409, %v407
        %v454 = vpack.c.b16 %v410, %v408
        %v455 = vpack.c.b16 %v413, %v411
        %v456 = vpack.c.b16 %v414, %v412
        %v457 = vpack.c.b16 %v417, %v415
        %v458 = vpack.c.b16 %v418, %v416
        %v459 = vpack.c.b16 %v421, %v419
        %v460 = vpack.c.b16 %v422, %v420
        %v461 = vpack.c.b16 %v425, %v423
        %v462 = vpack.c.b16 %v426, %v424
        %v463 = vpack.c.b16 %v429, %v427
        %v464 = vpack.c.b16 %v430, %v428
        %v465 = vpack.c.b16 %v433, %v431
        %v466 = vpack.c.b16 %v434, %v432
        %v467 = vpack.c.b16 %v435, %v435
        %v468 = vpack.c.b16 %v436, %v436
        %vm499 = vcmask 932864
        %v501 = vsel %vm499, %v312, 0
        %vm503 = vcmask 1040384
        %v505 = vsel %vm503, %v467, 0
        %v508 = vsel %vm503, %v468, 0
        %510 = vmatprep.subr.bf16.mxu0 %v452
        %511 = vmatpush1.bf16.msra.mxu0 %v451
        %512 = vmatprep.subr.bf16.mxu0 %v450
        %513 = vmatpush1.bf16.msra.mxu0 %v449
        %514 = vmatprep.subr.bf16.mxu0 %v448
        %515 = vmatpush1.bf16.msra.mxu0 %v447
        %516 = vmatprep.subr.bf16.mxu0 %v446
        %517 = vmatpush1.bf16.msra.mxu0 %v445
        %518 = vmatprep.subr.bf16.mxu0 %v444
        %519 = vmatpush1.bf16.msra.mxu0 %v443
        %520 = vmatprep.subr.bf16.mxu0 %v442
        %521 = vmatpush1.bf16.msra.mxu0 %v441
        %522 = vmatprep.subr.bf16.mxu0 %v440
        %523 = vmatpush1.bf16.msra.mxu0 %v439
        %524 = vmatprep.subr.bf16.mxu0 %v438
        %525 = vmatpush1.bf16.msra.mxu0 %v437
        %526 = vmatprep.subr.bf16.mxu0 %v508
        %527 = vmatpush2.bf16.msra.mxu0 %v505
        %528 = vmatprep.subr.bf16.mxu0 %v466
        %529 = vmatpush2.bf16.msra.mxu0 %v465
        %530 = vmatprep.subr.bf16.mxu0 %v464
        %531 = vmatpush2.bf16.msra.mxu0 %v463
        %532 = vmatprep.subr.bf16.mxu0 %v462
        %533 = vmatpush2.bf16.msra.mxu0 %v461
        %534 = vmatprep.subr.bf16.mxu0 %v460
        %535 = vmatpush2.bf16.msra.mxu0 %v459
        %536 = vmatprep.subr.bf16.mxu0 %v458
        %537 = vmatpush2.bf16.msra.mxu0 %v457
        %538 = vmatprep.subr.bf16.mxu0 %v456
        %539 = vmatpush2.bf16.msra.mxu0 %v455
        %540 = vmatprep.subr.bf16.mxu0 %v454
        %541 = vmatpush2.bf16.msra.mxu0 %v453
        %542 = vmatprep.mubr.bf16.mxu0 %v501
        %543 = vmatmul.mubr.bf16.gmra.mxu0 %v311
        %v544 = vpop.f32.mrf.mxu0
        %v545 = vadd.f32 0.0, %v544
        %v546 = vpop.f32.mrf.mxu0
        %v547 = vadd.f32 0.0, %v546
        %v548 = vpop.f32.mrf.mxu0
        %v549 = vadd.f32 0.0, %v548
        %v550 = vpop.f32.mrf.mxu0
        %v551 = vadd.f32 0.0, %v550
        %552 = vdwg.mxu0
        %v553 = vmax.f32 %v545, 0.0
        %v554 = vmax.f32 %v547, 0.0
        %v555 = vmax.f32 %v549, 0.0
        %v556 = vmax.f32 %v551, 0.0
        %v557 = vpack.c.bf16 %v555, %v553
        %v558 = vpack.c.bf16 %v556, %v554
        %v559 = vld [vmem:[#allocation7] sm:$0xf]
        %v560 = vld [vmem:[#allocation7 + $0x4] sm:$0xf]
        %v561 = vld [vmem:[#allocation7 + $0x8] sm:$0xf]
        %v562 = vld [vmem:[#allocation7 + $0xc] sm:$0xf]
        %v563 = vld [vmem:[#allocation7 + $0x10] sm:$0xf]
        %v564 = vld [vmem:[#allocation7 + $0x14] sm:$0xf]
        %v565 = vld [vmem:[#allocation7 + $0x18] sm:$0xf]
        %v566 = vld [vmem:[#allocation7 + $0x1c] sm:$0xf]
        %v567 = vld [vmem:[#allocation7 + $0x20] sm:$0xf]
        %v568 = vld [vmem:[#allocation7 + $0x24] sm:$0xf]
        %v569 = vld [vmem:[#allocation7 + $0x28] sm:$0xf]
        %v570 = vld [vmem:[#allocation7 + $0x2c] sm:$0xf]
        %v571 = vld [vmem:[#allocation7 + $0x30] sm:$0xf]
        %v572 = vld [vmem:[#allocation7 + $0x34] sm:$0xf]
        %v573 = vld [vmem:[#allocation7 + $0x38] sm:$0xf]
        %v574 = vld [vmem:[#allocation7 + $0x3c] sm:$0xf]
        %v575 = vld [vmem:[#allocation7 + $0x40] sm:$0xf]
        %v576 = vld [vmem:[#allocation7 + $0x44] sm:$0xf]
        %v577 = vld [vmem:[#allocation7 + $0x48] sm:$0xf]
        %v578 = vld [vmem:[#allocation7 + $0x4c] sm:$0xf]
        %v579 = vld [vmem:[#allocation7 + $0x50] sm:$0xf]
        %v580 = vld [vmem:[#allocation7 + $0x54] sm:$0xf]
        %v581 = vld [vmem:[#allocation7 + $0x58] sm:$0xf]
        %v582 = vld [vmem:[#allocation7 + $0x5c] sm:$0xf]
        %v583 = vld [vmem:[#allocation7 + $0x60] sm:$0xf]
        %v584 = vld [vmem:[#allocation7 + $0x64] sm:$0xf]
        %v585 = vld [vmem:[#allocation7 + $0x68] sm:$0xf]
        %v586 = vld [vmem:[#allocation7 + $0x6c] sm:$0xf]
        %v587 = vld [vmem:[#allocation7 + $0x70] sm:$0xf]
        %v588 = vld [vmem:[#allocation7 + $0x74] sm:$0xf]
        %v589 = vld [vmem:[#allocation7 + $0x78] sm:$0xf]
        %v590 = vld [vmem:[#allocation7 + $0x7c] sm:$0xf]
        %v623 = vunpack.c.l.b16 %v559
        %v624 = vunpack.c.l.b16 %v560
        %v625 = vunpack.c.l.b16 %v561
        %v626 = vunpack.c.l.b16 %v562
        %v627 = vunpack.c.l.b16 %v563
        %v628 = vunpack.c.l.b16 %v564
        %v629 = vunpack.c.l.b16 %v565
        %v630 = vunpack.c.l.b16 %v566
        %v631 = vunpack.c.l.b16 %v567
        %v632 = vunpack.c.l.b16 %v568
        %v633 = vunpack.c.l.b16 %v569
        %v634 = vunpack.c.l.b16 %v570
        %v635 = vunpack.c.l.b16 %v571
        %v636 = vunpack.c.l.b16 %v572
        %v637 = vunpack.c.l.b16 %v573
        %v638 = vunpack.c.l.b16 %v574
        %v639 = vunpack.c.l.b16 %v575
        %v640 = vunpack.c.l.b16 %v576
        %v641 = vunpack.c.l.b16 %v577
        %v642 = vunpack.c.l.b16 %v578
        %v643 = vunpack.c.l.b16 %v579
        %v644 = vunpack.c.l.b16 %v580
        %v645 = vunpack.c.l.b16 %v581
        %v646 = vunpack.c.l.b16 %v582
        %v647 = vunpack.c.l.b16 %v583
        %v648 = vunpack.c.l.b16 %v584
        %v649 = vunpack.c.l.b16 %v585
        %v650 = vunpack.c.l.b16 %v586
        %v651 = vunpack.c.l.b16 %v587
        %v652 = vunpack.c.l.b16 %v588
        %v653 = vunpack.c.l.b16 %v589
        %v654 = vunpack.c.l.b16 %v590
        %v655 = vpack.c.b16 %v624, %v623
        %v656 = vpack.c.b16 %v626, %v625
        %v657 = vpack.c.b16 %v628, %v627
        %v658 = vpack.c.b16 %v630, %v629
        %v659 = vpack.c.b16 %v632, %v631
        %v660 = vpack.c.b16 %v634, %v633
        %v661 = vpack.c.b16 %v636, %v635
        %v662 = vpack.c.b16 %v638, %v637
        %v663 = vpack.c.b16 %v640, %v639
        %v664 = vpack.c.b16 %v642, %v641
        %v665 = vpack.c.b16 %v644, %v643
        %v666 = vpack.c.b16 %v646, %v645
        %v667 = vpack.c.b16 %v648, %v647
        %v668 = vpack.c.b16 %v650, %v649
        %v669 = vpack.c.b16 %v652, %v651
        %v670 = vpack.c.b16 %v654, %v653
        %687 = vmatprep.subr.bf16.mxu0 0
        %688 = vmatpush1.bf16.msra.mxu0 %v662
        %689 = vmatprep.subr.bf16.mxu0 0
        %690 = vmatpush1.bf16.msra.mxu0 %v661
        %691 = vmatprep.subr.bf16.mxu0 0
        %692 = vmatpush1.bf16.msra.mxu0 %v660
        %693 = vmatprep.subr.bf16.mxu0 0
        %694 = vmatpush1.bf16.msra.mxu0 %v659
        %695 = vmatprep.subr.bf16.mxu0 0
        %696 = vmatpush1.bf16.msra.mxu0 %v658
        %697 = vmatprep.subr.bf16.mxu0 0
        %698 = vmatpush1.bf16.msra.mxu0 %v657
        %699 = vmatprep.subr.bf16.mxu0 0
        %700 = vmatpush1.bf16.msra.mxu0 %v656
        %701 = vmatprep.subr.bf16.mxu0 0
        %702 = vmatpush1.bf16.msra.mxu0 %v655
        %703 = vmatprep.subr.bf16.mxu0 0
        %704 = vmatpush2.bf16.msra.mxu0 %v670
        %705 = vmatprep.subr.bf16.mxu0 0
        %706 = vmatpush2.bf16.msra.mxu0 %v669
        %707 = vmatprep.subr.bf16.mxu0 0
        %708 = vmatpush2.bf16.msra.mxu0 %v668
        %709 = vmatprep.subr.bf16.mxu0 0
        %710 = vmatpush2.bf16.msra.mxu0 %v667
        %711 = vmatprep.subr.bf16.mxu0 0
        %712 = vmatpush2.bf16.msra.mxu0 %v666
        %713 = vmatprep.subr.bf16.mxu0 0
        %714 = vmatpush2.bf16.msra.mxu0 %v665
        %715 = vmatprep.subr.bf16.mxu0 0
        %716 = vmatpush2.bf16.msra.mxu0 %v664
        %717 = vmatprep.subr.bf16.mxu0 0
        %718 = vmatpush2.bf16.msra.mxu0 %v663
        %719 = vmatprep.mubr.bf16.mxu0 %v558
        %720 = vmatmul.mubr.bf16.gmra.mxu0 %v557
        %v721 = vpop.f32.mrf.mxu0
        %v722 = vadd.f32 0.0, %v721
        %v723 = vpop.f32.mrf.mxu0
        %v724 = vpop.f32.mrf.mxu0
        %v725 = vadd.f32 0.0, %v724
        %v726 = vpop.f32.mrf.mxu0
        %727 = vdwg.mxu0
        %v728 = vmax.f32 %v722, 0.0
        %v729 = vmax.f32 %v725, 0.0
        %v730 = vpack.c.bf16 %v729, %v728
        %v731 = vld [vmem:[#allocation8] sm:$0xf]
        %v732 = vld [vmem:[#allocation8 + $0x4] sm:$0xf]
        %v733 = vld [vmem:[#allocation8 + $0x8] sm:$0xf]
        %v734 = vld [vmem:[#allocation8 + $0xc] sm:$0xf]
        %v735 = vld [vmem:[#allocation8 + $0x10] sm:$0xf]
        %v736 = vld [vmem:[#allocation8 + $0x14] sm:$0xf]
        %v737 = vld [vmem:[#allocation8 + $0x18] sm:$0xf]
        %v738 = vld [vmem:[#allocation8 + $0x1c] sm:$0xf]
        %v739 = vld [vmem:[#allocation8 + $0x20] sm:$0xf]
        %v740 = vld [vmem:[#allocation8 + $0x24] sm:$0xf]
        %v741 = vld [vmem:[#allocation8 + $0x28] sm:$0xf]
        %v742 = vld [vmem:[#allocation8 + $0x2c] sm:$0xf]
        %v743 = vld [vmem:[#allocation8 + $0x30] sm:$0xf]
        %v744 = vld [vmem:[#allocation8 + $0x34] sm:$0xf]
        %v745 = vld [vmem:[#allocation8 + $0x38] sm:$0xf]
        %v746 = vld [vmem:[#allocation8 + $0x3c] sm:$0xf]
        %v747 = vld [vmem:[%s4] sm:$0x1]
        %v749 = vlaneseq
        %v750 = vshrl.u32 %v749, 7
        %v751 = vsub.s32 0, %v750
        %v752 = vrot.slane %v747, %v751
        %v770 = vunpack.c.l.b16 %v731
        %v771 = vunpack.c.l.b16 %v732
        %v772 = vunpack.c.l.b16 %v733
        %v773 = vunpack.c.l.b16 %v734
        %v774 = vunpack.c.l.b16 %v735
        %v775 = vunpack.c.l.b16 %v736
        %v776 = vunpack.c.l.b16 %v737
        %v777 = vunpack.c.l.b16 %v738
        %v778 = vunpack.c.l.b16 %v739
        %v779 = vunpack.c.l.b16 %v740
        %v780 = vunpack.c.l.b16 %v741
        %v781 = vunpack.c.l.b16 %v742
        %v782 = vunpack.c.l.b16 %v743
        %v783 = vunpack.c.l.b16 %v744
        %v784 = vunpack.c.l.b16 %v745
        %v785 = vunpack.c.l.b16 %v746
        %v786 = vpack.c.b16 %v771, %v770
        %v787 = vpack.c.b16 %v773, %v772
        %v788 = vpack.c.b16 %v775, %v774
        %v789 = vpack.c.b16 %v777, %v776
        %v790 = vpack.c.b16 %v779, %v778
        %v791 = vpack.c.b16 %v781, %v780
        %v792 = vpack.c.b16 %v783, %v782
        %v793 = vpack.c.b16 %v785, %v784
        %802 = vmatprep.subr.bf16.mxu0 0
        %803 = vmatpush1.bf16.msra.mxu0 %v793
        %804 = vmatprep.subr.bf16.mxu0 0
        %805 = vmatpush1.bf16.msra.mxu0 %v792
        %806 = vmatprep.subr.bf16.mxu0 0
        %807 = vmatpush1.bf16.msra.mxu0 %v791
        %808 = vmatprep.subr.bf16.mxu0 0
        %809 = vmatpush1.bf16.msra.mxu0 %v790
        %810 = vmatprep.subr.bf16.mxu0 0
        %811 = vmatpush1.bf16.msra.mxu0 %v789
        %812 = vmatprep.subr.bf16.mxu0 0
        %813 = vmatpush1.bf16.msra.mxu0 %v788
        %814 = vmatprep.subr.bf16.mxu0 0
        %815 = vmatpush1.bf16.msra.mxu0 %v787
        %816 = vmatprep.subr.bf16.mxu0 0
        %817 = vmatpush1.bf16.msra.mxu0 %v786
        %818 = vmatprep.subr.bf16.mxu0 0
        %819 = vmatpush2.bf16.msra.mxu0 0
        %820 = vmatprep.subr.bf16.mxu0 0
        %821 = vmatpush2.bf16.msra.mxu0 0
        %822 = vmatprep.subr.bf16.mxu0 0
        %823 = vmatpush2.bf16.msra.mxu0 0
        %824 = vmatprep.subr.bf16.mxu0 0
        %825 = vmatpush2.bf16.msra.mxu0 0
        %826 = vmatprep.subr.bf16.mxu0 0
        %827 = vmatpush2.bf16.msra.mxu0 0
        %828 = vmatprep.subr.bf16.mxu0 0
        %829 = vmatpush2.bf16.msra.mxu0 0
        %830 = vmatprep.subr.bf16.mxu0 0
        %831 = vmatpush2.bf16.msra.mxu0 0
        %832 = vmatprep.subr.bf16.mxu0 0
        %833 = vmatpush2.bf16.msra.mxu0 0
        %834 = vmatprep.mubr.bf16.mxu0 0
        %835 = vmatmul.mubr.bf16.gmra.mxu0 %v730
        %v836 = vpop.f32.mrf.mxu0
        %v837 = vadd.f32 %v752, %v836
        %v838 = vpop.f32.mrf.mxu0
        %v839 = vpop.f32.mrf.mxu0
        %v840 = vadd.f32 %v752, %v839
        %v841 = vpop.f32.mrf.mxu0
        %842 = vdwg.mxu0
        %vm843 = vcmask 990208
        %844 = vst.msk [vmem:[%s294] sm:$0xff] %vm843, %v837
        %845 = vst.msk [vmem:[%s294 + $0x8] sm:$0xff] %vm843, %v840
        %s846 = sand.u32 %s142, 1
        %s847 = scalar_lea.sflag [#allocation4], %s846
        %s848 = sand.u32 %s142, 1
        %s849 = smul.addr %s848, 16
        %s850 = scalar_lea.vmem [#allocation10], %s849
        // Predicated region
        $region57: #{tpu_custom_call.1} parent=39 // pred_check
          %p851 = pneg %p152
        $region58: #{tpu_custom_call.1} parent=39 // pred_check_branch
          %853 = sbr.rel (%p851) target = $region60
        $region59: #{tpu_custom_call.1} parent=39 // pred_region
          %s854 = smul.u32 2, %s24
          %s855 = ssub.s32 3, %s854
          %p856 = scmp.lt.s32.totalorder %s855, 2
          %s857 = scalar_select %p856, %s855, 2
          %s858 = smul.u32 128, %s857
          %s860 = ssub.s32 256, %s858
          %861 = vsyncadd %s847, %s860
          %p862 = scmp.ne.s32.totalorder 0, %s858
          %s863 = smul.addr %s854, 128
          %s864 = scalar_lea.hbm %s5, %s863
          %s865 = smul.u32 8, %s857
          %s866 = sshll.u32 %s850, 4
          %s867 = int_to_ptr.vmem [resolvable:$true] %s866
          %s868 = sshll.u32 %s865, 4
          %872 = dma.vmem_to_hbm [thread:$0]  (%p862), %s867, %s868, %s864, %s847, 128, 128, 8
        $region60: #{tpu_custom_call.1} parent=39 // pred_fallthru
          _
      $region40: #{tpu_custom_call.1} parent=5 // pred_fallthru
        _
      %p873 = scmp.le.s32.totalorder 2, %s19
      // Predicated region
      $region61: #{tpu_custom_call.1} parent=5 // pred_check
        %p874 = pneg %p873
      $region62: #{tpu_custom_call.1} parent=5 // pred_check_branch
        %876 = sbr.rel (%p874) target = $region64
      $region63: #{tpu_custom_call.1} parent=5 // pred_region
        %s877 = ssub.s32 %s19, 2
        // Predicated region
        $region65: #{tpu_custom_call.1} parent=63 // pred_check
          %p878 = pneg %p158
        $region66: #{tpu_custom_call.1} parent=63 // pred_check_branch
          %880 = sbr.rel (%p878) target = $region68
        $region67: #{tpu_custom_call.1} parent=63 // pred_region
          %s881 = sand.u32 %s143, 1
          %s882 = scalar_lea.sflag [#allocation4], %s881
          %s883 = sand.u32 %s143, 1
          %s884 = smul.addr %s883, 16
          %s885 = scalar_lea.vmem [#allocation10], %s884
          %886 = dma.done %s882, 256
        $region68: #{tpu_custom_call.1} parent=63 // pred_fallthru
          _
      $region64: #{tpu_custom_call.1} parent=5 // pred_fallthru
        _
    $region6: #{tpu_custom_call.1} parent=1 // loop_footer
      %s23 = sadd.s32 1, %s19
    $region7: #{tpu_custom_call.1} parent=1 // loop_footer_branch
      %18 = sbr.rel target = $region3
    $region8: #{tpu_custom_call.1} parent=1 // loop_exit
      _
    %887 = vsyncpa [#allocation3], 1
    %s888 = scalar_lea.sflag [#allocation3], 1
    %889 = vsyncpa %s888, 1
    %890 = vsyncpa [#allocation6], 1
    %891 = vsyncpa [#allocation9], 1
    %892 = vsyncpa [#allocation4], 1
    %s893 = scalar_lea.sflag [#allocation4], 1
    %894 = vsyncpa %s893, 1

</llo_original>
